<compile_context>
chip_gen: v7x
topology: tpu7x:2x2x1
jax: 0.10.0
libtpu: 0.0.40
codegen_flags: <defaults>
</compile_context>

<pallas_src>
import jax
import jax.numpy as jnp
from jax.experimental import pallas as pl
from jax.experimental.pallas import tpu as pltpu

LANE = 128

# ---------------------------------------------------------------------------
# Parameter slab layout (single f32 buffer, shape (232, 128)):
#   rows   0:192, lanes  0:64  -> W0  (192, 64)   layer 0, MXU (cast to bf16)
#   rows 192:224, lanes  0:64  -> W1^T (32, 64)   layer 1, VPU lane-reduce
#   rows 192:224, lanes 64:80  -> W2   (32, 16)   layer 2, VPU sublane-reduce
#   rows 192:200, lanes 80:96  -> W3^T ( 8, 16)   layer 3, VPU lane-reduce
#   rows 192:200, lane  96     -> W4   ( 8,)      layer 4, VPU sublane-reduce
#   rows 192:224, lane  97     -> b1 as a column (32,)
#   rows 192:200, lane  98     -> b3 as a column ( 8,)
#   row  224,     lanes 0:64   -> b0 row (zero-padded to 128)
#   row  225,     lanes 0:16   -> b2 row
#   row  226,     lane  0      -> b4 scalar
# All multi-row block starts (0, 192, 224) are multiples of 8 (sublane tile).
# ---------------------------------------------------------------------------


def mlp_kernel(x_ref, p_ref, o_ref):
    f32 = jnp.float32

    def sigmoid(z):
        # exp + approximate reciprocal both land on the EUP slot.
        return pl.reciprocal(1.0 + jnp.exp(-z), approx=True)

    # ---- layer 0 : (1,192) @ (192,128) -- MXU, bf16 operands, f32 accum ----
    # Full 128-lane width (padding columns/bias lanes are zero); slice after.
    x = x_ref[...].astype(jnp.bfloat16)                        # (1,192)
    w0 = p_ref[0:192, :].astype(jnp.bfloat16)                  # (192,128)
    z0 = jnp.dot(x, w0, preferred_element_type=f32) + p_ref[224:225, :]
    h0 = sigmoid(z0)[:, 0:64]                                  # (1,64) row

    # ---- layer 1 : 64 -> 32 -- VPU multiply + lane reduction -> column ----
    w1t = p_ref[192:224, 0:64]                                 # (32,64) = W1^T
    z1 = jnp.sum(h0 * w1t, axis=1, keepdims=True) + p_ref[192:224, 97:98]
    h1 = sigmoid(z1)                                           # (32,1) column

    # ---- layer 2 : 32 -> 16 -- VPU multiply + sublane reduction -> row ----
    w2 = p_ref[192:224, 64:80]                                 # (32,16)
    z2 = jnp.sum(h1 * w2, axis=0, keepdims=True) + p_ref[225:226, 0:16]
    h2 = sigmoid(z2)                                           # (1,16) row

    # ---- layer 3 : 16 -> 8 -- VPU multiply + lane reduction -> column ----
    w3t = p_ref[192:200, 80:96]                                # (8,16) = W3^T
    z3 = jnp.sum(h2 * w3t, axis=1, keepdims=True) + p_ref[192:200, 98:99]
    h3 = sigmoid(z3)                                           # (8,1) column

    # ---- layer 4 : 8 -> 1 -- VPU multiply + sublane reduction -> scalar ----
    w4 = p_ref[192:200, 96:97]                                 # (8,1)
    z4 = jnp.sum(h3 * w4, axis=0, keepdims=True) + p_ref[226:227, 0:1]
    o_ref[...] = sigmoid(z4).astype(o_ref.dtype)               # (1,1)


def mlp_forward(x, pslab):
    assert x.shape == (1, 192), "kernel is specialized to the module's batch=1 input"
    return pl.pallas_call(
        mlp_kernel,
        out_shape=jax.ShapeDtypeStruct((x.shape[0], 1), jnp.float32),
        # No grid: everything is tiny and lives whole-array in VMEM.
        in_specs=[pl.BlockSpec(memory_space=pltpu.MemorySpace.VMEM)] * 2,
        out_specs=pl.BlockSpec(memory_space=pltpu.MemorySpace.VMEM),
    )(x, pslab)


def init_linear(key, in_features, out_features):
    """Mirrors torch.nn.Linear init: U(-1/sqrt(in), 1/sqrt(in)).
    W is stored (in, out) == torch W.T so the forward computes x @ W directly."""
    kw, kb = jax.random.split(key)
    bound = 1.0 / (in_features ** 0.5)
    w = jax.random.uniform(kw, (in_features, out_features), jnp.float32,
                           minval=-bound, maxval=bound)
    b = jax.random.uniform(kb, (out_features,), jnp.float32,
                           minval=-bound, maxval=bound)
    return w, b


def pack_params(params):
    """Pack all weights and biases into one f32 slab (232, 128)."""
    (w0, b0), (w1, b1), (w2, b2), (w3, b3), (w4, b4) = params
    p = jnp.zeros((232, LANE), jnp.float32)
    p = p.at[0:192, 0:64].set(w0)            # W0
    p = p.at[192:224, 0:64].set(w1.T)        # W1^T (lane-reduce form)
    p = p.at[192:224, 64:80].set(w2)         # W2   (sublane-reduce form)
    p = p.at[192:200, 80:96].set(w3.T)       # W3^T (lane-reduce form)
    p = p.at[192:200, 96].set(w4[:, 0])      # W4 column
    p = p.at[192:224, 97].set(b1)            # b1 column
    p = p.at[192:200, 98].set(b3)            # b3 column
    p = p.at[224, 0:64].set(b0)              # b0 row
    p = p.at[225, 0:16].set(b2)              # b2 row
    p = p.at[226, 0].set(b4[0])              # b4 scalar
    return p


if __name__ == "__main__":
    key = jax.random.PRNGKey(0)
    k_x, k0, k1, k2, k3, k4 = jax.random.split(key, 6)

    # Input matches the module: x1 = torch.randn(1, 192)
    x = jax.random.normal(k_x, (1, 192), jnp.float32)

    dims = [(192, 64), (64, 32), (32, 16), (16, 8), (8, 1)]
    params = [init_linear(k, din, dout)
              for k, (din, dout) in zip([k0, k1, k2, k3, k4], dims)]
    pslab = pack_params(params)

    out = jax.block_until_ready(mlp_forward(x, pslab))

    # Pure-JAX reference.  Layer 0 mirrors the kernel's bf16 MXU operands
    # (f32 bias / accumulation); layers 1-4 are full f32, exactly like the
    # kernel's VPU tail.  The only remaining delta is the EUP-approximate
    # reciprocal inside sigmoid, hence the modest tolerance.
    q = lambda a: a.astype(jnp.bfloat16).astype(jnp.float32)
    ref = jax.nn.sigmoid(q(x) @ q(params[0][0]) + params[0][1])
    for w, b in params[1:]:
        ref = jax.nn.sigmoid(ref @ w + b)

    assert out.shape == (1, 1)
    assert jnp.allclose(out, ref, atol=5e-3, rtol=5e-3), (out, ref)

    print("KERNEL_OK")
</pallas_src>

<mosaic_0001>
module attributes {stable_mosaic.version = 11 : i64} {
  func.func @mlp_kernel(%arg0: memref<1x192xf32, #tpu.memory_space<vmem>>, %arg1: memref<232x128xf32, #tpu.memory_space<vmem>>, %arg2: memref<1x1xf32, #tpu.memory_space<vmem>>) attributes {dimension_semantics = [], scalar_prefetch = 0 : i64, scratch_operands = 0 : i64, tpu.core_type = #tpu.core_type<tc>} {
    %c0 = arith.constant 0 : index
    %c0_0 = arith.constant 0 : index
    %0 = vector.load %arg0[%c0, %c0_0] : memref<1x192xf32, #tpu.memory_space<vmem>>, vector<1x192xf32>
    %1 = arith.truncf %0 : vector<1x192xf32> to vector<1x192xbf16>
    %c0_1 = arith.constant 0 : index
    %c0_2 = arith.constant 0 : index
    %2 = vector.load %arg1[%c0_1, %c0_2] : memref<232x128xf32, #tpu.memory_space<vmem>>, vector<192x128xf32>
    %3 = arith.truncf %2 : vector<192x128xf32> to vector<192x128xbf16>
    %cst = arith.constant dense<0.000000e+00> : vector<1x128xf32>
    %4 = tpu.matmul %1, %3, %cst {dimension_numbers = #tpu.dot_dimension_numbers<[1], [0], [0], [1], [0, 0, 1, 1], [], []>} : vector<1x192xbf16>, vector<192x128xbf16>, vector<1x128xf32> -> vector<1x128xf32>
    %c224 = arith.constant 224 : index
    %c0_3 = arith.constant 0 : index
    %5 = vector.load %arg1[%c224, %c0_3] : memref<232x128xf32, #tpu.memory_space<vmem>>, vector<1x128xf32>
    %6 = arith.addf %4, %5 : vector<1x128xf32>
    %cst_4 = arith.constant 0.000000e+00 : f32
    %7 = vector.broadcast %cst_4 : f32 to vector<1x128xf32>
    %8 = arith.subf %7, %6 : vector<1x128xf32>
    %9 = math.exp %8 : vector<1x128xf32>
    %cst_5 = arith.constant 1.000000e+00 : f32
    %10 = vector.broadcast %cst_5 : f32 to vector<1x128xf32>
    %11 = arith.addf %10, %9 : vector<1x128xf32>
    %12 = tpu.reciprocal %11 {approx = true} : vector<1x128xf32> -> vector<1x128xf32>
    %13 = vector.extract_strided_slice %12 {offsets = [0, 0], sizes = [1, 64], strides = [1, 1]} : vector<1x128xf32> to vector<1x64xf32>
    %c192 = arith.constant 192 : index
    %c0_6 = arith.constant 0 : index
    %14 = vector.load %arg1[%c192, %c0_6] : memref<232x128xf32, #tpu.memory_space<vmem>>, vector<32x64xf32>
    %15 = vector.broadcast %13 : vector<1x64xf32> to vector<32x64xf32>
    %16 = arith.mulf %15, %14 : vector<32x64xf32>
    %cst_7 = arith.constant dense<0.000000e+00> : vector<32xf32>
    %17 = vector.multi_reduction <add>, %16, %cst_7 [1] : vector<32x64xf32> to vector<32xf32>
    %18 = vector.shape_cast %17 : vector<32xf32> to vector<32x1xf32>
    %c192_8 = arith.constant 192 : index
    %c97 = arith.constant 97 : index
    %19 = vector.load %arg1[%c192_8, %c97] : memref<232x128xf32, #tpu.memory_space<vmem>>, vector<32x1xf32>
    %20 = arith.addf %18, %19 : vector<32x1xf32>
    %cst_9 = arith.constant 0.000000e+00 : f32
    %21 = vector.broadcast %cst_9 : f32 to vector<32x1xf32>
    %22 = arith.subf %21, %20 : vector<32x1xf32>
    %23 = math.exp %22 : vector<32x1xf32>
    %cst_10 = arith.constant 1.000000e+00 : f32
    %24 = vector.broadcast %cst_10 : f32 to vector<32x1xf32>
    %25 = arith.addf %24, %23 : vector<32x1xf32>
    %26 = tpu.reciprocal %25 {approx = true} : vector<32x1xf32> -> vector<32x1xf32>
    %c192_11 = arith.constant 192 : index
    %c64 = arith.constant 64 : index
    %27 = vector.load %arg1[%c192_11, %c64] : memref<232x128xf32, #tpu.memory_space<vmem>>, vector<32x16xf32>
    %28 = vector.broadcast %26 : vector<32x1xf32> to vector<32x16xf32>
    %29 = arith.mulf %28, %27 : vector<32x16xf32>
    %cst_12 = arith.constant dense<0.000000e+00> : vector<16xf32>
    %30 = vector.multi_reduction <add>, %29, %cst_12 [0] : vector<32x16xf32> to vector<16xf32>
    %31 = vector.shape_cast %30 : vector<16xf32> to vector<1x16xf32>
    %c225 = arith.constant 225 : index
    %c0_13 = arith.constant 0 : index
    %32 = vector.load %arg1[%c225, %c0_13] : memref<232x128xf32, #tpu.memory_space<vmem>>, vector<1x16xf32>
    %33 = arith.addf %31, %32 : vector<1x16xf32>
    %cst_14 = arith.constant 0.000000e+00 : f32
    %34 = vector.broadcast %cst_14 : f32 to vector<1x16xf32>
    %35 = arith.subf %34, %33 : vector<1x16xf32>
    %36 = math.exp %35 : vector<1x16xf32>
    %cst_15 = arith.constant 1.000000e+00 : f32
    %37 = vector.broadcast %cst_15 : f32 to vector<1x16xf32>
    %38 = arith.addf %37, %36 : vector<1x16xf32>
    %39 = tpu.reciprocal %38 {approx = true} : vector<1x16xf32> -> vector<1x16xf32>
    %c192_16 = arith.constant 192 : index
    %c80 = arith.constant 80 : index
    %40 = vector.load %arg1[%c192_16, %c80] : memref<232x128xf32, #tpu.memory_space<vmem>>, vector<8x16xf32>
    %41 = vector.broadcast %39 : vector<1x16xf32> to vector<8x16xf32>
    %42 = arith.mulf %41, %40 : vector<8x16xf32>
    %cst_17 = arith.constant dense<0.000000e+00> : vector<8xf32>
    %43 = vector.multi_reduction <add>, %42, %cst_17 [1] : vector<8x16xf32> to vector<8xf32>
    %44 = vector.shape_cast %43 : vector<8xf32> to vector<8x1xf32>
    %c192_18 = arith.constant 192 : index
    %c98 = arith.constant 98 : index
    %45 = vector.load %arg1[%c192_18, %c98] : memref<232x128xf32, #tpu.memory_space<vmem>>, vector<8x1xf32>
    %46 = arith.addf %44, %45 : vector<8x1xf32>
    %cst_19 = arith.constant 0.000000e+00 : f32
    %47 = vector.broadcast %cst_19 : f32 to vector<8x1xf32>
    %48 = arith.subf %47, %46 : vector<8x1xf32>
    %49 = math.exp %48 : vector<8x1xf32>
    %cst_20 = arith.constant 1.000000e+00 : f32
    %50 = vector.broadcast %cst_20 : f32 to vector<8x1xf32>
    %51 = arith.addf %50, %49 : vector<8x1xf32>
    %52 = tpu.reciprocal %51 {approx = true} : vector<8x1xf32> -> vector<8x1xf32>
    %c192_21 = arith.constant 192 : index
    %c96 = arith.constant 96 : index
    %53 = vector.load %arg1[%c192_21, %c96] : memref<232x128xf32, #tpu.memory_space<vmem>>, vector<8x1xf32>
    %54 = arith.mulf %52, %53 : vector<8x1xf32>
    %cst_22 = arith.constant dense<0.000000e+00> : vector<1xf32>
    %55 = vector.multi_reduction <add>, %54, %cst_22 [0] : vector<8x1xf32> to vector<1xf32>
    %56 = vector.shape_cast %55 : vector<1xf32> to vector<1x1xf32>
    %c226 = arith.constant 226 : index
    %c0_23 = arith.constant 0 : index
    %57 = vector.load %arg1[%c226, %c0_23] : memref<232x128xf32, #tpu.memory_space<vmem>>, vector<1x1xf32>
    %58 = arith.addf %56, %57 : vector<1x1xf32>
    %cst_24 = arith.constant 0.000000e+00 : f32
    %59 = vector.broadcast %cst_24 : f32 to vector<1x1xf32>
    %60 = arith.subf %59, %58 : vector<1x1xf32>
    %61 = math.exp %60 : vector<1x1xf32>
    %cst_25 = arith.constant 1.000000e+00 : f32
    %62 = vector.broadcast %cst_25 : f32 to vector<1x1xf32>
    %63 = arith.addf %62, %61 : vector<1x1xf32>
    %64 = tpu.reciprocal %63 {approx = true} : vector<1x1xf32> -> vector<1x1xf32>
    %c0_26 = arith.constant 0 : index
    %c0_27 = arith.constant 0 : index
    %65 = vector.load %arg2[%c0_26, %c0_27] : memref<1x1xf32, #tpu.memory_space<vmem>>, vector<1x1xf32>
    tpu.vector_store %arg2[%c0_26, %c0_27], %64 {strides = array<i32>} : memref<1x1xf32, #tpu.memory_space<vmem>>, vector<1x1xf32>,
    return
  }
}

</mosaic_0001>

<llo_original>
// kernel: tpu_custom_call.1
$region0: #{tpu_custom_call.1}
  #allocation0 [shape = 'u32[]', space=smem, size = 0x4, offset = 0x4, fixed_abs, tag = 'smem constant byte address 0x4 - core index']
  #allocation1 [shape = 'u32[144,128]{1,0:T(1,128)}', space=vmem, size = 0x12000, scoped, tag = 'internal scratch']
  %s0 = inlined_call_operand.hbm [shape: f32[1,192], index: 0, kind: input, shape index: {}]
  %s1 = inlined_call_operand.hbm [shape: f32[232,128], index: 1, kind: input, shape index: {}]
  %s2 = inlined_call_operand.hbm [shape: f32[1,1], index: 2, kind: output, shape index: {}]
  %s3 = sld [smem:[#allocation0]]
  $region26: #{tpu_custom_call.1} parent=0
    _
  %s5 = ssub.s32 1, %s3
  %s6 = scalar_select 0, %s5, %s3
  $region1: #{tpu_custom_call.1} parent=0
    #allocation2 [shape = 'u8[1024]{0}', space=vmem, size = 0x400, scoped, tag = 'input window, operand 0, single buffered']
    #allocation3 [shape = 's32[1]{0}', space=sflag, size = 0x4, scoped, tag = 'scoped memory for tpu_custom_call.1']
    #allocation4 [shape = 's32[1]{0}', space=sflag, size = 0x4, scoped, tag = 'scoped memory for tpu_custom_call.1']
    #allocation5 [shape = 'u8[118784]{0}', space=vmem, size = 0x1d000, scoped, tag = 'input window, operand 1, single buffered']
    #allocation6 [shape = 's32[1]{0}', space=sflag, size = 0x4, scoped, tag = 'scoped memory for tpu_custom_call.1']
    #allocation7 [shape = 'u8[512]{0}', space=vmem, size = 0x400, scoped, tag = 'output window, operand 0, single buffered']
    %7 = vsyncpa [#allocation3], 0
    %8 = vsyncpa [#allocation6], 0
    %9 = vsyncpa [#allocation4], 0
    // Predicated region
    $region2: #{tpu_custom_call.1} parent=1 // pred_check
      _
    $region3: #{tpu_custom_call.1} parent=1 // pred_check_branch
      %11 = sbr.rel (0) target = $region5
    $region4: #{tpu_custom_call.1} parent=1 // pred_region
      %s13 = ssub.s32 32, 32
      %14 = vsyncadd [#allocation3], %s13
      %s16 = sshll.u32 [#allocation2], 4
      %s17 = int_to_ptr.vmem [resolvable:$true] %s16
      %19 = dma.hbm_to_vmem [thread:$0]  %s0, 32, %s17, [#allocation3]
    $region5: #{tpu_custom_call.1} parent=1 // pred_fallthru
      _
    // Predicated region
    $region6: #{tpu_custom_call.1} parent=1 // pred_check
      _
    $region7: #{tpu_custom_call.1} parent=1 // pred_check_branch
      %21 = sbr.rel (0) target = $region9
    $region8: #{tpu_custom_call.1} parent=1 // pred_region
      %s23 = ssub.s32 3712, 3712
      %24 = vsyncadd [#allocation6], %s23
      %s25 = sshll.u32 [#allocation5], 4
      %s26 = int_to_ptr.vmem [resolvable:$true] %s25
      %31 = dma.hbm_to_vmem [thread:$0]  %s1, 3712, %s26, [#allocation6], 128, 128, 8
    $region9: #{tpu_custom_call.1} parent=1 // pred_fallthru
      _
    // Predicated region
    $region10: #{tpu_custom_call.1} parent=1 // pred_check
      _
    $region11: #{tpu_custom_call.1} parent=1 // pred_check_branch
      %33 = sbr.rel (0) target = $region13
    $region12: #{tpu_custom_call.1} parent=1 // pred_region
      %34 = dma.done [#allocation3], 32
    $region13: #{tpu_custom_call.1} parent=1 // pred_fallthru
      _
    // Predicated region
    $region14: #{tpu_custom_call.1} parent=1 // pred_check
      _
    $region15: #{tpu_custom_call.1} parent=1 // pred_check_branch
      %36 = sbr.rel (0) target = $region17
    $region16: #{tpu_custom_call.1} parent=1 // pred_region
      %37 = dma.done [#allocation6], 3712
    $region17: #{tpu_custom_call.1} parent=1 // pred_fallthru
      _
    %v39 = vld [vmem:[#allocation2] sm:$0x3]
    %v41 = vlaneseq
    %v42 = vshrl.u32 %v41, 7
    %v43 = vsub.s32 0, %v42
    %v44 = vrot.slane %v39, %v43
    %v45 = vlaneseq
    %v46 = vshrl.u32 %v45, 7
    %v47 = vsub.s32 1, %v46
    %v48 = vrot.slane %v39, %v47
    %v51 = vpack.c.bf16 %v44, %v44
    %v52 = vpack.c.bf16 %v48, %v48
    %v53 = vld [vmem:[#allocation5] sm:$0xff]
    %v54 = vld [vmem:[#allocation5 + $0x8] sm:$0xff]
    %v55 = vld [vmem:[#allocation5 + $0x10] sm:$0xff]
    %v56 = vld [vmem:[#allocation5 + $0x18] sm:$0xff]
    %v57 = vld [vmem:[#allocation5 + $0x20] sm:$0xff]
    %v58 = vld [vmem:[#allocation5 + $0x28] sm:$0xff]
    %v59 = vld [vmem:[#allocation5 + $0x30] sm:$0xff]
    %v60 = vld [vmem:[#allocation5 + $0x38] sm:$0xff]
    %v61 = vld [vmem:[#allocation5 + $0x40] sm:$0xff]
    %v62 = vld [vmem:[#allocation5 + $0x48] sm:$0xff]
    %v63 = vld [vmem:[#allocation5 + $0x50] sm:$0xff]
    %v64 = vld [vmem:[#allocation5 + $0x58] sm:$0xff]
    %v65 = vld [vmem:[#allocation5 + $0x60] sm:$0xff]
    %v66 = vld [vmem:[#allocation5 + $0x68] sm:$0xff]
    %v67 = vld [vmem:[#allocation5 + $0x70] sm:$0xff]
    %v68 = vld [vmem:[#allocation5 + $0x78] sm:$0xff]
    %v69 = vld [vmem:[#allocation5 + $0x80] sm:$0xff]
    %v70 = vld [vmem:[#allocation5 + $0x88] sm:$0xff]
    %v71 = vld [vmem:[#allocation5 + $0x90] sm:$0xff]
    %v72 = vld [vmem:[#allocation5 + $0x98] sm:$0xff]
    %v73 = vld [vmem:[#allocation5 + $0xa0] sm:$0xff]
    %v74 = vld [vmem:[#allocation5 + $0xa8] sm:$0xff]
    %v75 = vld [vmem:[#allocation5 + $0xb0] sm:$0xff]
    %v76 = vld [vmem:[#allocation5 + $0xb8] sm:$0xff]
    %v77 = vpack.c.bf16 %v54, %v53
    %v78 = vpack.c.bf16 %v56, %v55
    %v79 = vpack.c.bf16 %v58, %v57
    %v80 = vpack.c.bf16 %v60, %v59
    %v81 = vpack.c.bf16 %v62, %v61
    %v82 = vpack.c.bf16 %v64, %v63
    %v83 = vpack.c.bf16 %v66, %v65
    %v84 = vpack.c.bf16 %v68, %v67
    %v85 = vpack.c.bf16 %v70, %v69
    %v86 = vpack.c.bf16 %v72, %v71
    %v87 = vpack.c.bf16 %v74, %v73
    %v88 = vpack.c.bf16 %v76, %v75
    %v89 = vld [vmem:[#allocation5 + $0xe0] sm:$0x1]
    %vm90 = vcmask 523264
    %v92 = vsel %vm90, %v52, 0
    %94 = vmatprep.subr.bf16.mxu0 0
    %95 = vmatpush1.bf16.msra.mxu0 %v77
    %96 = vmatprep.subr.bf16.mxu0 0
    %97 = vmatpush1.bf16.msra.mxu0 %v78
    %98 = vmatprep.subr.bf16.mxu0 0
    %99 = vmatpush1.bf16.msra.mxu0 %v79
    %100 = vmatprep.subr.bf16.mxu0 0
    %101 = vmatpush1.bf16.msra.mxu0 %v80
    %102 = vmatprep.subr.bf16.mxu0 0
    %103 = vmatpush1.bf16.msra.mxu0 %v81
    %104 = vmatprep.subr.bf16.mxu0 0
    %105 = vmatpush1.bf16.msra.mxu0 %v82
    %106 = vmatprep.subr.bf16.mxu0 0
    %107 = vmatpush1.bf16.msra.mxu0 %v83
    %108 = vmatprep.subr.bf16.mxu0 0
    %109 = vmatpush1.bf16.msra.mxu0 %v84
    %110 = vmatprep.subr.bf16.mxu0 0
    %111 = vmatpush1.bf16.msra.mxu0 %v85
    %112 = vmatprep.subr.bf16.mxu0 0
    %113 = vmatpush1.bf16.msra.mxu0 %v86
    %114 = vmatprep.subr.bf16.mxu0 0
    %115 = vmatpush1.bf16.msra.mxu0 %v87
    %116 = vmatprep.subr.bf16.mxu0 0
    %117 = vmatpush1.bf16.msra.mxu0 %v88
    %118 = vmatprep.subr.bf16.mxu0 0
    %119 = vmatpush1.bf16.msra.mxu0 0
    %120 = vmatprep.subr.bf16.mxu0 0
    %121 = vmatpush1.bf16.msra.mxu0 0
    %122 = vmatprep.subr.bf16.mxu0 0
    %123 = vmatpush1.bf16.msra.mxu0 0
    %124 = vmatprep.subr.bf16.mxu0 0
    %125 = vmatpush1.bf16.msra.mxu0 0
    %126 = vmatprep.mubr.bf16.mxu0 %v92
    %127 = vmatmul.mubr.bf16.gmra.mrb[0].mxu0 %v51
    %v128 = vpop.f32.mrb[0].mxu0
    %v129 = vadd.f32 %v89, %v128
    %v130 = vpop.f32.mrb[0].mxu0
    %v131 = vpop.f32.mrb[0].mxu0
    %v132 = vpop.f32.mrb[0].mxu0
    %133 = vdwg.mxu0
    %v134 = vsub.f32 0.0, %v129
    %v135 = vmul.f32 %v134, 1.442695
    %v136 = vpow.pop %v135
    %v137 = vadd.f32 %v136, 1.0
    %v138 = vrcp.pop %v137
    %v139 = vld [vmem:[#allocation5 + $0xc0] sm:$0xff]
    %v140 = vld [vmem:[#allocation5 + $0xc8] sm:$0xff]
    %v141 = vld [vmem:[#allocation5 + $0xd0] sm:$0xff]
    %v142 = vld [vmem:[#allocation5 + $0xd8] sm:$0xff]
    %v143 = vlaneseq
    %v144 = vshrl.u32 %v143, 7
    %v145 = vsub.s32 0, %v144
    %v146 = vrot.slane %v138, %v145
    %v147 = vmul.f32 %v146, %v139
    %v148 = vmul.f32 %v146, %v140
    %v149 = vmul.f32 %v146, %v141
    %v150 = vmul.f32 %v146, %v142
    %v151 = vsel %vm90, %v147, 0.0
    %152 = vadd.xlane.f32.xlu0 %v151
    %v153 = vpop.xlane.xlu0 %152
    %v154 = vsel %vm90, %v148, 0.0
    %155 = vadd.xlane.f32.xlu0 %v154
    %v156 = vpop.xlane.xlu0 %155
    %v157 = vsel %vm90, %v149, 0.0
    %158 = vadd.xlane.f32.xlu0 %v157
    %v159 = vpop.xlane.xlu0 %158
    %v160 = vsel %vm90, %v150, 0.0
    %161 = vadd.xlane.f32.xlu0 %v160
    %v162 = vpop.xlane.xlu0 %161
    %v163 = vadd.f32 %v153, %v139
    %v164 = vadd.f32 %v156, %v140
    %v165 = vadd.f32 %v159, %v141
    %v166 = vadd.f32 %v162, %v142
    %v167 = vsub.f32 0.0, %v163
    %v168 = vsub.f32 0.0, %v164
    %v169 = vsub.f32 0.0, %v165
    %v170 = vsub.f32 0.0, %v166
    %v171 = vmul.f32 %v167, 1.442695
    %v172 = vpow.pop %v171
    %v173 = vmul.f32 %v168, 1.442695
    %v174 = vpow.pop %v173
    %v175 = vmul.f32 %v169, 1.442695
    %v176 = vpow.pop %v175
    %v177 = vmul.f32 %v170, 1.442695
    %v178 = vpow.pop %v177
    %v179 = vadd.f32 %v172, 1.0
    %v180 = vadd.f32 %v174, 1.0
    %v181 = vadd.f32 %v176, 1.0
    %v182 = vadd.f32 %v178, 1.0
    %v183 = vrcp.pop %v179
    %v184 = vrcp.pop %v180
    %v185 = vrcp.pop %v181
    %v186 = vrcp.pop %v182
    %188 = vset.pattern.permute.xlu0 97
    %189 = vperm.xlu0 %188, %v183
    %v190 = vpop.permute.xlu0 %189
    %193 = vset.pattern.permute.xlu0 97
    %194 = vperm.xlu0 %193, %v184
    %v195 = vpop.permute.xlu0 %194
    %198 = vset.pattern.permute.xlu0 97
    %199 = vperm.xlu0 %198, %v185
    %v200 = vpop.permute.xlu0 %199
    %203 = vset.pattern.permute.xlu0 97
    %204 = vperm.xlu0 %203, %v186
    %v205 = vpop.permute.xlu0 %204
    %v207 = vmul.f32 %v190, %v139
    %v208 = vmul.f32 %v195, %v140
    %v209 = vmul.f32 %v200, %v141
    %v210 = vmul.f32 %v205, %v142
    %vm211 = vcmask 654848
    %v212 = vsel %vm211, %v207, 0.0
    %v213 = vsel %vm211, %v208, 0.0
    %v214 = vadd.f32 %v212, %v213
    %v215 = vsel %vm211, %v209, 0.0
    %v216 = vadd.f32 %v214, %v215
    %v217 = vsel %vm211, %v210, 0.0
    %v218 = vadd.f32 %v216, %v217
    %v219 = vrot.slane %v218, 4
    %v220 = vadd.f32 %v218, %v219
    %v221 = vrot.slane %v220, 2
    %v222 = vadd.f32 %v220, %v221
    %v223 = vrot.slane %v222, 1
    %v224 = vadd.f32 %v222, %v223
    %v225 = vld [vmem:[#allocation5 + $0xe1] sm:$0x1]
    %227 = vrot.lane.b32.xlu0 %v225, 64
    %v228 = vpop.permute.xlu0 %227
    %v230 = vadd.f32 %v224, %v228
    %v231 = vsub.f32 0.0, %v230
    %v232 = vmul.f32 %v231, 1.442695
    %v233 = vpow.pop %v232
    %v234 = vadd.f32 %v233, 1.0
    %v235 = vrcp.pop %v234
    %v236 = vld [vmem:[#allocation5 + $0xc0] sm:$0xff]
    %v237 = vlaneseq
    %v238 = vshrl.u32 %v237, 7
    %v239 = vsub.s32 0, %v238
    %v240 = vrot.slane %v235, %v239
    %242 = vrot.lane.b32.xlu0 %v236, 112
    %v243 = vpop.permute.xlu0 %242
    %v245 = vmul.f32 %v240, %v243
    %247 = vrot.lane.b32.xlu0 %v245, 64
    %v248 = vpop.permute.xlu0 %247
    %vm250 = vcmask 130048
    %v251 = vsel %vm250, %v248, 0.0
    %252 = vadd.xlane.f32.xlu0 %v251
    %v253 = vpop.xlane.xlu0 %252
    %v254 = vadd.f32 %v253, %v236
    %v255 = vsub.f32 0.0, %v254
    %v256 = vmul.f32 %v255, 1.442695
    %v257 = vpow.pop %v256
    %v258 = vadd.f32 %v257, 1.0
    %v259 = vrcp.pop %v258
    %260 = vrot.lane.b32.xlu0 %v236, 2
    %v261 = vpop.permute.xlu0 %260
    %v263 = vmul.f32 %v259, %v261
    %vm264 = vcmask 810768
    %v265 = vsel %vm264, %v263, 0.0
    %v266 = vrot.slane %v265, 4
    %v267 = vadd.f32 %v265, %v266
    %v268 = vrot.slane %v267, 2
    %v269 = vadd.f32 %v267, %v268
    %v270 = vrot.slane %v269, 1
    %v271 = vadd.f32 %v269, %v270
    %v272 = vld [vmem:[#allocation5 + $0xe2] sm:$0x1]
    %274 = vrot.lane.b32.xlu0 %v272, 98
    %v275 = vpop.permute.xlu0 %274
    %v277 = vadd.f32 %v271, %v275
    %v278 = vsub.f32 0.0, %v277
    %v279 = vmul.f32 %v278, 1.442695
    %v280 = vpow.pop %v279
    %v281 = vadd.f32 %v280, 1.0
    %v282 = vrcp.pop %v281
    %284 = vrot.lane.b32.xlu0 %v282, 30
    %v285 = vpop.permute.xlu0 %284
    %vm287 = vcmask 0
    %288 = vst.msk [vmem:[#allocation7] sm:$0x1] %vm287, %v285
    // Predicated region
    $region18: #{tpu_custom_call.1} parent=1 // pred_check
      _
    $region19: #{tpu_custom_call.1} parent=1 // pred_check_branch
      %290 = sbr.rel (0) target = $region21
    $region20: #{tpu_custom_call.1} parent=1 // pred_region
      %s292 = ssub.s32 16, 16
      %293 = vsyncadd [#allocation4], %s292
      %s295 = sshll.u32 [#allocation7], 4
      %s296 = int_to_ptr.vmem [resolvable:$true] %s295
      %298 = dma.vmem_to_hbm [thread:$0]  %s296, 16, %s2, [#allocation4]
    $region21: #{tpu_custom_call.1} parent=1 // pred_fallthru
      _
    // Predicated region
    $region22: #{tpu_custom_call.1} parent=1 // pred_check
      _
    $region23: #{tpu_custom_call.1} parent=1 // pred_check_branch
      %300 = sbr.rel (0) target = $region25
    $region24: #{tpu_custom_call.1} parent=1 // pred_region
      %301 = dma.done [#allocation4], 16
    $region25: #{tpu_custom_call.1} parent=1 // pred_fallthru
      _
    %302 = vsyncpa [#allocation3], 1
    %303 = vsyncpa [#allocation6], 1
    %304 = vsyncpa [#allocation4], 1

</llo_original>
